<compile_context>
chip_gen: v7x
topology: tpu7x:2x2x1
jax: 0.10.0
libtpu: 0.0.40
codegen_flags: <defaults>
</compile_context>

<pallas_src>
import functools

import jax
import jax.numpy as jnp
from jax.experimental import pallas as pl
from jax.experimental.pallas import tpu as pltpu


def _round_up(x: int, m: int) -> int:
    return (x + m - 1) // m * m


def _pick_tile(dim_padded: int, max_tile: int, align: int) -> int:
    """Largest multiple of `align` that divides `dim_padded` and is <= max_tile."""
    t = max(align, min(max_tile, dim_padded) // align * align)
    while dim_padded % t != 0:
        t -= align
    return t


def _maybe_split_n(m_blocks: int, np_: int, tn_e: int) -> int:
    """If M contributes a single block, shrink tn so the N axis has >= 2 blocks
    (keeps both TensorCores busy on v7x; harmless on single-TC v5e/v6e)."""
    if m_blocks >= 2 or np_ // tn_e >= 2:
        return tn_e
    start = min(tn_e, np_ // 2) // 128 * 128
    for cand in range(start, 127, -128):
        if np_ % cand == 0:
            return cand
    return tn_e


@functools.lru_cache(maxsize=1)
def _vmem_capacity_bytes() -> int:
    try:
        return int(pltpu.get_tpu_info().vmem_capacity_bytes)
    except Exception:
        return 64 * 1024 * 1024  # conservative fallback (v7x per-TC VMEM)


def _kernel_f32_out(x_ref, w_ref, b_ref, o_ref):
    """f32 output: accumulate directly into the resident output block."""
    k = pl.program_id(2)
    part = jnp.dot(x_ref[...], w_ref[...], preferred_element_type=jnp.float32)

    @pl.when(k == 0)
    def _():
        o_ref[...] = part

    @pl.when(k != 0)
    def _():
        o_ref[...] += part

    @pl.when(k == pl.num_programs(2) - 1)
    def _():
        # Bias + ReLU epilogue in f32, once per output tile.
        o_ref[...] = jnp.maximum(o_ref[...] + b_ref[...], 0.0)


def _kernel_narrow_out(x_ref, w_ref, b_ref, o_ref, acc_ref):
    """Narrow output dtypes: f32 scratch accumulator, cast only at final store."""
    k = pl.program_id(2)
    part = jnp.dot(x_ref[...], w_ref[...], preferred_element_type=jnp.float32)

    @pl.when(k == 0)
    def _():
        acc_ref[...] = part

    @pl.when(k != 0)
    def _():
        acc_ref[...] += part

    @pl.when(k == pl.num_programs(2) - 1)
    def _():
        o_ref[...] = jnp.maximum(acc_ref[...] + b_ref[...], 0.0).astype(o_ref.dtype)


@functools.partial(
    jax.jit, static_argnames=("n_orig", "tm", "tn", "tk", "out_dtype", "buffers")
)
def _mylinear_core(x, w_p, b_p, *, n_orig, tm=256, tn=512, tk=1024,
                   out_dtype=None, buffers=2):
    """x: (M, K); w_p: (Kp, Np) bf16, pre-padded; b_p: (1, Np) f32, pre-padded."""
    M, K = x.shape
    Kp, Np = w_p.shape
    out_dt = jnp.dtype(out_dtype) if out_dtype is not None else jnp.dtype(x.dtype)

    Mp = _round_up(M, 8)
    tm_e = _pick_tile(Mp, tm, 8)
    tk_e = _pick_tile(Kp, tk, 128)
    tn_e = _pick_tile(Np, tn, 128)
    tn_e = _maybe_split_n(Mp // tm_e, Np, tn_e)
    grid = (Mp // tm_e, Np // tn_e, Kp // tk_e)

    # bf16 operands (accumulation stays f32 in-kernel); pad X only when needed.
    xb = x.astype(jnp.bfloat16)
    if Mp != M or Kp != K:
        xb = jnp.pad(xb, ((0, Mp - M), (0, Kp - K)))

    use_scratch = out_dt != jnp.dtype(jnp.float32)
    kernel = _kernel_narrow_out if use_scratch else _kernel_f32_out
    scratch = [pltpu.VMEM((tm_e, tn_e), jnp.float32)] if use_scratch else []

    def _spec(shape, imap):
        if buffers == 2:  # 2 is the default pipeline depth -> plain BlockSpec
            return pl.BlockSpec(shape, imap)
        return pl.BlockSpec(shape, imap, pipeline_mode=pl.Buffered(buffers))

    # Buffered bf16 input tiles + resident output tile + bias + optional scratch.
    footprint = (
        buffers * (tm_e * tk_e + tk_e * tn_e) * 2
        + 2 * tn_e * 4
        + 2 * tm_e * tn_e * out_dt.itemsize
        + (tm_e * tn_e * 4 if use_scratch else 0)
    )
    cap = _vmem_capacity_bytes()
    vmem_limit = int(min(max(2 * footprint + (4 << 20), 32 << 20), (cap * 3) // 4))

    cost = pl.CostEstimate(
        flops=2 * M * n_orig * K,
        transcendentals=0,
        bytes_accessed=(M * K + K * n_orig) * 2 + n_orig * 4
        + M * n_orig * out_dt.itemsize,
    )

    out_p = pl.pallas_call(
        kernel,
        out_shape=jax.ShapeDtypeStruct((Mp, Np), out_dt),
        grid_spec=pltpu.PrefetchScalarGridSpec(
            num_scalar_prefetch=0,
            grid=grid,
            in_specs=[
                _spec((tm_e, tk_e), lambda i, j, k: (i, k)),      # X tile
                _spec((tk_e, tn_e), lambda i, j, k: (k, j)),      # W tile
                pl.BlockSpec((1, tn_e), lambda i, j, k: (0, j)),  # bias slice
            ],
            out_specs=pl.BlockSpec((tm_e, tn_e), lambda i, j, k: (i, j)),
            scratch_shapes=scratch,
        ),
        compiler_params=pltpu.CompilerParams(
            dimension_semantics=("parallel", "parallel", "arbitrary"),
            vmem_limit_bytes=vmem_limit,
        ),
        cost_estimate=cost,
    )(xb, w_p, b_p)

    if Mp != M or Np != n_orig:
        out_p = out_p[:M, :n_orig]
    return out_p


class MyLinearPallas:
    """Pallas port of MyLinear: forward(X) = relu(X @ weight + bias).

    Weight/bias padding and the bf16 cast are hoisted here — done once at
    parameter setup, not on every forward call.
    """

    def __init__(self, weight, bias, *, tm=256, tn=512, tk=1024, buffers=2):
        in_units, units = weight.shape
        assert bias.shape == (units,)
        kp, np_ = _round_up(in_units, 128), _round_up(units, 128)
        w = jnp.asarray(weight, jnp.bfloat16)
        if (kp, np_) != (in_units, units):
            w = jnp.pad(w, ((0, kp - in_units), (0, np_ - units)))
        b = jnp.asarray(bias, jnp.float32).reshape(1, units)
        if np_ != units:
            b = jnp.pad(b, ((0, 0), (0, np_ - units)))
        self.w_p, self.b_p = w, b
        self.in_units, self.units = in_units, units
        self.tm, self.tn, self.tk, self.buffers = tm, tn, tk, buffers

    def __call__(self, x):
        assert x.ndim == 2 and x.shape[1] == self.in_units
        return _mylinear_core(
            x, self.w_p, self.b_p, n_orig=self.units,
            tm=self.tm, tn=self.tn, tk=self.tk,
            out_dtype=jnp.float32, buffers=self.buffers,
        )


def _ref(x, w, b):
    # Same numerics contract as the kernel: bf16 operands, f32 accumulation,
    # f32 bias + ReLU (documented accuracy change vs. pure-f32 matmul).
    y = jnp.dot(x.astype(jnp.bfloat16), w.astype(jnp.bfloat16),
                preferred_element_type=jnp.float32) + b.reshape(1, -1)
    return jnp.maximum(y, 0.0)


if __name__ == "__main__":
    key = jax.random.PRNGKey(0)
    k1, k2, k3, k4, k5, k6, k7, k8, k9 = jax.random.split(key, 9)

    # 1) MyLinear(in_units=32, units=16), batch=8 (small, heavy-padding case).
    batch, in_units, units = 8, 32, 16
    x = jax.random.normal(k1, (batch, in_units), dtype=jnp.float32)
    weight = jax.random.normal(k2, (in_units, units), dtype=jnp.float32)
    bias = jax.random.normal(k3, (units,), dtype=jnp.float32)
    layer = MyLinearPallas(weight, bias)
    out = jax.block_until_ready(layer(x))
    assert out.shape == (batch, units)
    assert jnp.allclose(out, _ref(x, weight, bias), atol=1e-3, rtol=1e-3)

    # 2) Non-multiple sizes: exercises 128-granular padding + multi-block N grid
    #    (tn auto-shrinks to expose >=2 parallel blocks when M has one block).
    M2, K2, N2 = 200, 300, 260
    x2 = jax.random.normal(k4, (M2, K2), dtype=jnp.float32)
    w2 = jax.random.normal(k5, (K2, N2), dtype=jnp.float32)
    b2 = jax.random.normal(k6, (N2,), dtype=jnp.float32)
    layer2 = MyLinearPallas(w2, b2)
    out2 = jax.block_until_ready(layer2(x2))
    assert out2.shape == (M2, N2)
    assert jnp.allclose(out2, _ref(x2, w2, b2), atol=2e-3, rtol=2e-3)

    # 3) Multi-tile grid on all three axes (exercises k>0 accumulation path).
    M3, K3, N3 = 256, 512, 384
    x3 = jax.random.normal(k7, (M3, K3), dtype=jnp.float32)
    w3 = jax.random.normal(k8, (K3, N3), dtype=jnp.float32)
    b3 = jax.random.normal(k9, (N3,), dtype=jnp.float32)
    layer3 = MyLinearPallas(w3, b3, tm=128, tn=128, tk=256)
    out3 = jax.block_until_ready(layer3(x3))
    assert out3.shape == (M3, N3)
    assert jnp.allclose(out3, _ref(x3, w3, b3), atol=2e-3, rtol=2e-3)

    print("KERNEL_OK")
</pallas_src>

<mosaic_0001>
module attributes {stable_mosaic.version = 11 : i64} {
  func.func @_kernel_f32_out(%arg0: i32, %arg1: i32, %arg2: i32, %arg3: memref<8x128xbf16, #tpu.memory_space<vmem>>, %arg4: memref<128x128xbf16, #tpu.memory_space<vmem>>, %arg5: memref<1x128xf32, #tpu.memory_space<vmem>>, %arg6: memref<8x128xf32, #tpu.memory_space<vmem>>) attributes {dimension_semantics = [#tpu.dimension_semantics<parallel>, #tpu.dimension_semantics<parallel>, #tpu.dimension_semantics<arbitrary>], iteration_bounds = array<i64: 1, 1, 1>, scalar_prefetch = 0 : i64, scratch_operands = 0 : i64, tpu.core_type = #tpu.core_type<tc>, window_params = [{transform_indices = @transform_0, window_bounds = array<i64: 8, 128>}, {transform_indices = @transform_1, window_bounds = array<i64: 128, 128>}, {transform_indices = @transform_2, window_bounds = array<i64: 1, 128>}, {transform_indices = @transform_3, window_bounds = array<i64: 8, 128>}]} {
    %c0 = arith.constant 0 : index
    %c0_0 = arith.constant 0 : index
    %0 = vector.load %arg3[%c0, %c0_0] : memref<8x128xbf16, #tpu.memory_space<vmem>>, vector<8x128xbf16>
    %c0_1 = arith.constant 0 : index
    %c0_2 = arith.constant 0 : index
    %1 = vector.load %arg4[%c0_1, %c0_2] : memref<128x128xbf16, #tpu.memory_space<vmem>>, vector<128x128xbf16>
    %cst = arith.constant dense<0.000000e+00> : vector<8x128xf32>
    %2 = tpu.matmul %0, %1, %cst {dimension_numbers = #tpu.dot_dimension_numbers<[1], [0], [0], [1], [0, 0, 1, 1], [], []>} : vector<8x128xbf16>, vector<128x128xbf16>, vector<8x128xf32> -> vector<8x128xf32>
    %c0_i32 = arith.constant 0 : i32
    %3 = arith.cmpi eq, %arg2, %c0_i32 : i32
    %4 = arith.extui %3 : i1 to i32
    %c0_i32_3 = arith.constant 0 : i32
    %5 = arith.cmpi ne, %4, %c0_i32_3 : i32
    scf.if %5 {
      %c0_8 = arith.constant 0 : index
      %c0_9 = arith.constant 0 : index
      %12 = vector.load %arg6[%c0_8, %c0_9] : memref<8x128xf32, #tpu.memory_space<vmem>>, vector<8x128xf32>
      tpu.vector_store %arg6[%c0_8, %c0_9], %2 {strides = array<i32>} : memref<8x128xf32, #tpu.memory_space<vmem>>, vector<8x128xf32>,
    } else {
    }
    %c0_i32_4 = arith.constant 0 : i32
    %6 = arith.cmpi ne, %arg2, %c0_i32_4 : i32
    %7 = arith.extui %6 : i1 to i32
    %c0_i32_5 = arith.constant 0 : i32
    %8 = arith.cmpi ne, %7, %c0_i32_5 : i32
    scf.if %8 {
      %c0_8 = arith.constant 0 : index
      %c0_9 = arith.constant 0 : index
      %12 = vector.load %arg6[%c0_8, %c0_9] : memref<8x128xf32, #tpu.memory_space<vmem>>, vector<8x128xf32>
      %13 = arith.addf %12, %2 : vector<8x128xf32>
      %c0_10 = arith.constant 0 : index
      %c0_11 = arith.constant 0 : index
      %14 = vector.load %arg6[%c0_10, %c0_11] : memref<8x128xf32, #tpu.memory_space<vmem>>, vector<8x128xf32>
      tpu.vector_store %arg6[%c0_10, %c0_11], %13 {strides = array<i32>} : memref<8x128xf32, #tpu.memory_space<vmem>>, vector<8x128xf32>,
    } else {
    }
    %c0_i32_6 = arith.constant 0 : i32
    %9 = arith.cmpi eq, %arg2, %c0_i32_6 : i32
    %10 = arith.extui %9 : i1 to i32
    %c0_i32_7 = arith.constant 0 : i32
    %11 = arith.cmpi ne, %10, %c0_i32_7 : i32
    scf.if %11 {
      %c0_8 = arith.constant 0 : index
      %c0_9 = arith.constant 0 : index
      %12 = vector.load %arg6[%c0_8, %c0_9] : memref<8x128xf32, #tpu.memory_space<vmem>>, vector<8x128xf32>
      %c0_10 = arith.constant 0 : index
      %c0_11 = arith.constant 0 : index
      %13 = vector.load %arg5[%c0_10, %c0_11] : memref<1x128xf32, #tpu.memory_space<vmem>>, vector<1x128xf32>
      %14 = vector.broadcast %13 : vector<1x128xf32> to vector<8x128xf32>
      %15 = arith.addf %12, %14 : vector<8x128xf32>
      %cst_12 = arith.constant 0.000000e+00 : f32
      %16 = vector.broadcast %cst_12 : f32 to vector<8x128xf32>
      %17 = arith.maximumf %15, %16 : vector<8x128xf32>
      %c0_13 = arith.constant 0 : index
      %c0_14 = arith.constant 0 : index
      %18 = vector.load %arg6[%c0_13, %c0_14] : memref<8x128xf32, #tpu.memory_space<vmem>>, vector<8x128xf32>
      tpu.vector_store %arg6[%c0_13, %c0_14], %17 {strides = array<i32>} : memref<8x128xf32, #tpu.memory_space<vmem>>, vector<8x128xf32>,
    } else {
    }
    return
  }
  func.func @transform_0(%arg0: i32, %arg1: i32, %arg2: i32) -> (i32, i32) {
    %c0_i32 = arith.constant 0 : i32
    return %arg0, %arg2 : i32, i32
  }
  func.func @transform_1(%arg0: i32, %arg1: i32, %arg2: i32) -> (i32, i32) {
    %c0_i32 = arith.constant 0 : i32
    return %arg2, %arg1 : i32, i32
  }
  func.func @transform_2(%arg0: i32, %arg1: i32, %arg2: i32) -> (i32, i32) {
    %c0_i32 = arith.constant 0 : i32
    %c0_i32_0 = arith.constant 0 : i32
    return %c0_i32, %arg1 : i32, i32
  }
  func.func @transform_3(%arg0: i32, %arg1: i32, %arg2: i32) -> (i32, i32) {
    %c0_i32 = arith.constant 0 : i32
    return %arg0, %arg1 : i32, i32
  }
}

</mosaic_0001>

<llo_original>
// kernel: _mylinear_core.1
$region0: #{_mylinear_core.1}
  #allocation0 [shape = 'u32[]', space=smem, size = 0x4, offset = 0x4, fixed_abs, tag = 'smem constant byte address 0x4 - core index']
  #allocation1 [shape = 'u32[144,128]{1,0:T(1,128)}', space=vmem, size = 0x12000, scoped, tag = 'internal scratch']
  %s0 = inlined_call_operand.vmem [shape: bf16[8,128], index: 0, kind: input, shape index: {}]
  %s1 = inlined_call_operand.hbm [shape: bf16[128,128], index: 1, kind: input, shape index: {}]
  %s2 = inlined_call_operand.vmem [shape: f32[1,128], index: 2, kind: input, shape index: {}]
  %s3 = inlined_call_operand.hbm [shape: f32[8,128], index: 3, kind: output, shape index: {}]
  %s4 = sld [smem:[#allocation0]]
  $region38: #{_mylinear_core.1} parent=0
    _
  %s6 = ssub.s32 1, %s4
  %s7 = scalar_select 0, %s6, %s4
  $region1: #{_mylinear_core.1} parent=0
    #allocation2 [shape = 'u8[32768]{0}', space=vmem, size = 0x8000, scoped, tag = 'input window, operand 1, single buffered']
    #allocation3 [shape = 's32[1]{0}', space=sflag, size = 0x4, scoped, tag = 'scoped memory for _mylinear_core.1']
    #allocation4 [shape = 's32[1]{0}', space=sflag, size = 0x4, scoped, tag = 'scoped memory for _mylinear_core.1']
    #allocation5 [shape = 'u8[4096]{0}', space=vmem, size = 0x1000, scoped, tag = 'output window, operand 0, single buffered']
    %8 = vsyncpa [#allocation3], 0
    %9 = vsyncpa [#allocation4], 0
    // Predicated region
    $region2: #{_mylinear_core.1} parent=1 // pred_check
      _
    $region3: #{_mylinear_core.1} parent=1 // pred_check_branch
      %11 = sbr.rel (0) target = $region5
    $region4: #{_mylinear_core.1} parent=1 // pred_region
      _
    $region5: #{_mylinear_core.1} parent=1 // pred_fallthru
      _
    // Predicated region
    $region6: #{_mylinear_core.1} parent=1 // pred_check
      _
    $region7: #{_mylinear_core.1} parent=1 // pred_check_branch
      %13 = sbr.rel (0) target = $region9
    $region8: #{_mylinear_core.1} parent=1 // pred_region
      %s15 = ssub.s32 1024, 1024
      %16 = vsyncadd [#allocation3], %s15
      %s17 = sshll.u32 [#allocation2], 4
      %s18 = int_to_ptr.vmem [resolvable:$true] %s17
      %23 = dma.hbm_to_vmem [thread:$0]  %s1, 1024, %s18, [#allocation3], 64, 64, 4
    $region9: #{_mylinear_core.1} parent=1 // pred_fallthru
      _
    // Predicated region
    $region10: #{_mylinear_core.1} parent=1 // pred_check
      _
    $region11: #{_mylinear_core.1} parent=1 // pred_check_branch
      %25 = sbr.rel (0) target = $region13
    $region12: #{_mylinear_core.1} parent=1 // pred_region
      _
    $region13: #{_mylinear_core.1} parent=1 // pred_fallthru
      _
    // Predicated region
    $region14: #{_mylinear_core.1} parent=1 // pred_check
      _
    $region15: #{_mylinear_core.1} parent=1 // pred_check_branch
      %27 = sbr.rel (0) target = $region17
    $region16: #{_mylinear_core.1} parent=1 // pred_region
      %28 = dma.done [#allocation3], 1024
    $region17: #{_mylinear_core.1} parent=1 // pred_fallthru
      _
    %v30 = vld [vmem:[%s0] sm:$0xf]
    %v31 = vld [vmem:[#allocation2] sm:$0xf]
    %v32 = vld [vmem:[#allocation2 + $0x4] sm:$0xf]
    %v33 = vld [vmem:[#allocation2 + $0x8] sm:$0xf]
    %v34 = vld [vmem:[#allocation2 + $0xc] sm:$0xf]
    %v35 = vld [vmem:[#allocation2 + $0x10] sm:$0xf]
    %v36 = vld [vmem:[#allocation2 + $0x14] sm:$0xf]
    %v37 = vld [vmem:[#allocation2 + $0x18] sm:$0xf]
    %v38 = vld [vmem:[#allocation2 + $0x1c] sm:$0xf]
    %v39 = vld [vmem:[#allocation2 + $0x20] sm:$0xf]
    %v40 = vld [vmem:[#allocation2 + $0x24] sm:$0xf]
    %v41 = vld [vmem:[#allocation2 + $0x28] sm:$0xf]
    %v42 = vld [vmem:[#allocation2 + $0x2c] sm:$0xf]
    %v43 = vld [vmem:[#allocation2 + $0x30] sm:$0xf]
    %v44 = vld [vmem:[#allocation2 + $0x34] sm:$0xf]
    %v45 = vld [vmem:[#allocation2 + $0x38] sm:$0xf]
    %v46 = vld [vmem:[#allocation2 + $0x3c] sm:$0xf]
    %v63 = vunpack.c.l.b16 %v31
    %v64 = vunpack.c.l.b16 %v32
    %v65 = vunpack.c.l.b16 %v33
    %v66 = vunpack.c.l.b16 %v34
    %v67 = vunpack.c.l.b16 %v35
    %v68 = vunpack.c.l.b16 %v36
    %v69 = vunpack.c.l.b16 %v37
    %v70 = vunpack.c.l.b16 %v38
    %v71 = vunpack.c.l.b16 %v39
    %v72 = vunpack.c.l.b16 %v40
    %v73 = vunpack.c.l.b16 %v41
    %v74 = vunpack.c.l.b16 %v42
    %v75 = vunpack.c.l.b16 %v43
    %v76 = vunpack.c.l.b16 %v44
    %v77 = vunpack.c.l.b16 %v45
    %v78 = vunpack.c.l.b16 %v46
    %v79 = vpack.c.b16 %v64, %v63
    %v80 = vpack.c.b16 %v66, %v65
    %v81 = vpack.c.b16 %v68, %v67
    %v82 = vpack.c.b16 %v70, %v69
    %v83 = vpack.c.b16 %v72, %v71
    %v84 = vpack.c.b16 %v74, %v73
    %v85 = vpack.c.b16 %v76, %v75
    %v86 = vpack.c.b16 %v78, %v77
    %95 = vmatprep.subr.bf16.mxu0 0
    %96 = vmatpush1.bf16.msra.mxu0 %v79
    %97 = vmatprep.subr.bf16.mxu0 0
    %98 = vmatpush1.bf16.msra.mxu0 %v80
    %99 = vmatprep.subr.bf16.mxu0 0
    %100 = vmatpush1.bf16.msra.mxu0 %v81
    %101 = vmatprep.subr.bf16.mxu0 0
    %102 = vmatpush1.bf16.msra.mxu0 %v82
    %103 = vmatprep.subr.bf16.mxu0 0
    %104 = vmatpush1.bf16.msra.mxu0 %v83
    %105 = vmatprep.subr.bf16.mxu0 0
    %106 = vmatpush1.bf16.msra.mxu0 %v84
    %107 = vmatprep.subr.bf16.mxu0 0
    %108 = vmatpush1.bf16.msra.mxu0 %v85
    %109 = vmatprep.subr.bf16.mxu0 0
    %110 = vmatpush1.bf16.msra.mxu0 %v86
    %111 = vmatprep.subr.bf16.mxu0 0
    %112 = vmatpush1.bf16.msra.mxu0 0
    %113 = vmatprep.subr.bf16.mxu0 0
    %114 = vmatpush1.bf16.msra.mxu0 0
    %115 = vmatprep.subr.bf16.mxu0 0
    %116 = vmatpush1.bf16.msra.mxu0 0
    %117 = vmatprep.subr.bf16.mxu0 0
    %118 = vmatpush1.bf16.msra.mxu0 0
    %119 = vmatprep.subr.bf16.mxu0 0
    %120 = vmatpush1.bf16.msra.mxu0 0
    %121 = vmatprep.subr.bf16.mxu0 0
    %122 = vmatpush1.bf16.msra.mxu0 0
    %123 = vmatprep.subr.bf16.mxu0 0
    %124 = vmatpush1.bf16.msra.mxu0 0
    %125 = vmatprep.subr.bf16.mxu0 0
    %126 = vmatpush1.bf16.msra.mxu0 0
    %127 = vmatprep.mubr.bf16.mxu0 0
    %128 = vmatmul.mubr.bf16.gmra.mrb[0].mxu0 %v30
    %v129 = vpop.f32.mrb[0].mxu0
    %v130 = vadd.f32 0.0, %v129
    %v131 = vpop.f32.mrb[0].mxu0
    %v132 = vpop.f32.mrb[0].mxu0
    %v133 = vpop.f32.mrb[0].mxu0
    %134 = vdwg.mxu0
    %p135 = scmp.eq.s32.totalorder 0, 0
    // Predicated region
    $region18: #{_mylinear_core.1} parent=1 // pred_check
      %p136 = pneg %p135
    $region19: #{_mylinear_core.1} parent=1 // pred_check_branch
      %138 = sbr.rel (%p136) target = $region21
    $region20: #{_mylinear_core.1} parent=1 // pred_region
      %139 = vst [vmem:[#allocation5] sm:$0xff] %v130
    $region21: #{_mylinear_core.1} parent=1 // pred_fallthru
      _
    %p140 = scmp.ne.s32.totalorder 0, 0
    // Predicated region
    $region22: #{_mylinear_core.1} parent=1 // pred_check
      %p141 = pneg %p140
    $region23: #{_mylinear_core.1} parent=1 // pred_check_branch
      %143 = sbr.rel (%p141) target = $region25
    $region24: #{_mylinear_core.1} parent=1 // pred_region
      %v144 = vld [vmem:[#allocation5] sm:$0xff]
      %v145 = vadd.f32 %v144, %v130
      %146 = vst [vmem:[#allocation5] sm:$0xff] %v145
    $region25: #{_mylinear_core.1} parent=1 // pred_fallthru
      _
    // Predicated region
    $region26: #{_mylinear_core.1} parent=1 // pred_check
      %p147 = pneg %p135
    $region27: #{_mylinear_core.1} parent=1 // pred_check_branch
      %149 = sbr.rel (%p147) target = $region29
    $region28: #{_mylinear_core.1} parent=1 // pred_region
      %v150 = vld [vmem:[#allocation5] sm:$0xff]
      %v151 = vld [vmem:[%s2] sm:$0x1]
      %v153 = vlaneseq
      %v154 = vshrl.u32 %v153, 7
      %v155 = vsub.s32 0, %v154
      %v156 = vrot.slane %v151, %v155
      %v158 = vadd.f32 %v150, %v156
      %v159 = vmax.f32 %v158, 0.0
      %160 = vst [vmem:[#allocation5] sm:$0xff] %v159
    $region29: #{_mylinear_core.1} parent=1 // pred_fallthru
      _
    // Predicated region
    $region30: #{_mylinear_core.1} parent=1 // pred_check
      _
    $region31: #{_mylinear_core.1} parent=1 // pred_check_branch
      %162 = sbr.rel (0) target = $region33
    $region32: #{_mylinear_core.1} parent=1 // pred_region
      %s164 = ssub.s32 128, 128
      %165 = vsyncadd [#allocation4], %s164
      %s167 = sshll.u32 [#allocation5], 4
      %s168 = int_to_ptr.vmem [resolvable:$true] %s167
      %170 = dma.vmem_to_hbm [thread:$0]  %s168, 128, %s3, [#allocation4]
    $region33: #{_mylinear_core.1} parent=1 // pred_fallthru
      _
    // Predicated region
    $region34: #{_mylinear_core.1} parent=1 // pred_check
      _
    $region35: #{_mylinear_core.1} parent=1 // pred_check_branch
      %172 = sbr.rel (0) target = $region37
    $region36: #{_mylinear_core.1} parent=1 // pred_region
      %173 = dma.done [#allocation4], 128
    $region37: #{_mylinear_core.1} parent=1 // pred_fallthru
      _
    %174 = vsyncpa [#allocation3], 1
    %175 = vsyncpa [#allocation4], 1

</llo_original>
